<compile_context>
chip_gen: v5e
topology: v5e:2x2
jax: 0.10.0
libtpu: 0.0.40
codegen_flags: <defaults>
</compile_context>

<pallas_src>
import functools

import jax
import jax.numpy as jnp
from jax.experimental import pallas as pl
from jax.experimental.pallas import tpu as pltpu

_LANES = 128
_MAX_BLOCK_ROWS = 2048   # (2048, 128) f32 tile = 1 MiB per buffer
_MIN_BLOCK_ROWS = 16     # keep sub-32-bit sublane packing clean


def _cdiv(a, b):
    return -(-a // b)


def _round_up(x, m):
    return ((x + m - 1) // m) * m


def _make_kernel(*, margin, total, block_rows, need_mask, weighted,
                 with_scores):
    """Elementwise hinge for one (block_rows, 128) tile + (8,128) partial sum."""

    def kernel(*refs):
        it = iter(refs)
        p_ref = next(it)
        n_ref = next(it)
        w_ref = next(it) if weighted else None
        inv_wmean_ref = next(it) if weighted else None   # (1,) f32 in SMEM
        scores_ref = next(it) if with_scores else None
        psum_ref = next(it)

        p = p_ref[...].astype(jnp.float32)
        n = n_ref[...].astype(jnp.float32)
        s = jnp.maximum(margin + p - n, 0.0)
        if weighted:
            w = w_ref[...].astype(jnp.float32)
            s = s * (w * inv_wmean_ref[0])

        if need_mask:
            # Zero out lane padding and the ragged tail of the last tile.
            row_i = jax.lax.broadcasted_iota(jnp.int32, s.shape, 0)
            lane_i = jax.lax.broadcasted_iota(jnp.int32, s.shape, 1)
            flat = (pl.program_id(0) * block_rows + row_i) * _LANES + lane_i
            s = jnp.where(flat < total, s, 0.0)

        if with_scores:
            scores_ref[...] = s.astype(scores_ref.dtype)

        # (8, 128)-aligned per-tile partial sum (unmasked store, one vreg).
        psum_ref[...] = jnp.sum(s.reshape(block_rows // 8, 8, _LANES), axis=0)

    return kernel


def margin_ranking_loss(p_enrgs, n_enrgs, margin, weights=None, *,
                        return_scores=True):
    """Returns (scores.mean(), scores), matching the PyTorch module.

    If return_scores=False, returns (scores.mean(), None) and skips the
    scores HBM writeback entirely.
    """
    p_enrgs = jnp.asarray(p_enrgs)
    n_enrgs = jnp.asarray(n_enrgs)
    assert p_enrgs.shape == n_enrgs.shape
    orig_shape = p_enrgs.shape
    b = p_enrgs.size

    weighted = weights is not None
    if weighted:
        weights = jnp.asarray(weights)
        assert weights.size == b
        out_dtype = jnp.result_type(p_enrgs.dtype, n_enrgs.dtype, weights.dtype)
    else:
        out_dtype = jnp.result_type(p_enrgs.dtype, n_enrgs.dtype)

    # ---- lay the 1-D batch out as a dense (rows, 128) slab ------------------
    rows = _cdiv(b, _LANES)
    pad = rows * _LANES - b            # < 128; only lane padding, never rows

    # block_rows: >= 2 balanced tiles when possible (v7x megacore), capped at
    # _MAX_BLOCK_ROWS, multiple of 16.  Ragged last tile is masked in-kernel.
    num_tiles_target = max(2, _cdiv(rows, _MAX_BLOCK_ROWS))
    block_rows = _round_up(_cdiv(rows, num_tiles_target), _MIN_BLOCK_ROWS)
    num_tiles = _cdiv(rows, block_rows)
    need_mask = (num_tiles * block_rows * _LANES) != b

    def to_slab(x):
        flat = x.reshape(-1)
        if pad:
            flat = jnp.pad(flat, (0, pad))   # zeros; masked in-kernel
        return flat.reshape(rows, _LANES)    # free reshape when pad == 0

    p2 = to_slab(p_enrgs)
    n2 = to_slab(n_enrgs)

    block_spec = pl.BlockSpec((block_rows, _LANES), lambda i: (i, 0))
    psum_spec = pl.BlockSpec((8, _LANES), lambda i: (i, 0))

    in_arrays = [p2, n2]
    in_specs = [block_spec, block_spec]
    in_bytes = p2.dtype.itemsize + n2.dtype.itemsize

    if weighted:
        w2 = to_slab(weights)                 # keep weights' own dtype
        inv_wmean = (1.0 / jnp.mean(
            weights.reshape(-1).astype(jnp.float32))).reshape(1)
        in_arrays += [w2, inv_wmean]
        in_specs += [block_spec,
                     pl.BlockSpec(memory_space=pltpu.MemorySpace.SMEM)]
        in_bytes += w2.dtype.itemsize

    out_shape = []
    out_specs = []
    if return_scores:
        out_shape.append(jax.ShapeDtypeStruct((rows, _LANES), out_dtype))
        out_specs.append(block_spec)
    out_shape.append(jax.ShapeDtypeStruct((num_tiles * 8, _LANES), jnp.float32))
    out_specs.append(psum_spec)

    bytes_accessed = in_bytes * b + num_tiles * 8 * _LANES * 4
    if return_scores:
        bytes_accessed += b * jnp.dtype(out_dtype).itemsize
    cost = pl.CostEstimate(flops=(5 if weighted else 3) * b,
                           transcendentals=0,
                           bytes_accessed=bytes_accessed)

    kernel = _make_kernel(margin=float(margin), total=b,
                          block_rows=block_rows, need_mask=need_mask,
                          weighted=weighted, with_scores=return_scores)

    outs = pl.pallas_call(
        kernel,
        out_shape=tuple(out_shape),
        grid=(num_tiles,),
        in_specs=in_specs,
        out_specs=tuple(out_specs),
        compiler_params=pltpu.CompilerParams(
            dimension_semantics=("parallel",)),
        cost_estimate=cost,
    )(*in_arrays)

    if return_scores:
        scores_p, partials = outs
    else:
        (partials,) = outs

    # Tiny epilogue: reduce per-tile partials, divide by the true batch size.
    mean = (jnp.sum(partials) / b).astype(out_dtype)

    if not return_scores:
        return mean, None
    if pad:
        scores = scores_p.reshape(-1)[:b].reshape(orig_shape)
    else:
        scores = scores_p.reshape(orig_shape)
    return mean, scores


def _reference(p, n, margin, weights=None):
    s = jnp.maximum(margin + p - n, 0.0)
    if weights is not None:
        s = s * weights / jnp.mean(weights)
    return jnp.mean(s), s


if __name__ == "__main__":
    key = jax.random.PRNGKey(0)
    k1, k2, k3 = jax.random.split(key, 3)
    margin = 1.0

    # Ragged batch: exercises lane padding + in-kernel mask.
    B = 300
    p_enrgs = jax.random.normal(k1, (B,), dtype=jnp.float32)
    n_enrgs = jax.random.normal(k2, (B,), dtype=jnp.float32)
    weights = jax.random.uniform(k3, (B,), dtype=jnp.float32) + 0.5

    # Unweighted path
    mean_k, scores_k = margin_ranking_loss(p_enrgs, n_enrgs, margin)
    jax.block_until_ready((mean_k, scores_k))
    mean_r, scores_r = _reference(p_enrgs, n_enrgs, margin)
    assert jnp.allclose(mean_k, mean_r, atol=1e-5, rtol=1e-5)
    assert jnp.allclose(scores_k, scores_r, atol=1e-5, rtol=1e-5)

    # Weighted path
    mean_kw, scores_kw = margin_ranking_loss(p_enrgs, n_enrgs, margin, weights)
    jax.block_until_ready((mean_kw, scores_kw))
    mean_rw, scores_rw = _reference(p_enrgs, n_enrgs, margin, weights)
    assert jnp.allclose(mean_kw, mean_rw, atol=1e-5, rtol=1e-5)
    assert jnp.allclose(scores_kw, scores_rw, atol=1e-5, rtol=1e-5)

    # Mean-only fast path (skips the scores writeback)
    mean_m, no_scores = margin_ranking_loss(p_enrgs, n_enrgs, margin,
                                            return_scores=False)
    jax.block_until_ready(mean_m)
    assert no_scores is None
    assert jnp.allclose(mean_m, mean_r, atol=1e-5, rtol=1e-5)

    # Aligned batch (no padding, no mask, multi-tile path)
    B2 = 4096
    p2 = jax.random.normal(k1, (B2,), dtype=jnp.float32)
    n2 = jax.random.normal(k2, (B2,), dtype=jnp.float32)
    mean2_k, scores2_k = margin_ranking_loss(p2, n2, margin)
    jax.block_until_ready((mean2_k, scores2_k))
    mean2_r, scores2_r = _reference(p2, n2, margin)
    assert jnp.allclose(mean2_k, mean2_r, atol=1e-5, rtol=1e-5)
    assert jnp.allclose(scores2_k, scores2_r, atol=1e-5, rtol=1e-5)

    print("KERNEL_OK")
</pallas_src>

<mosaic_0001>
module attributes {stable_mosaic.version = 11 : i64} {
  func.func @kernel(%arg0: i32, %arg1: memref<16x128xf32, #tpu.memory_space<vmem>>, %arg2: memref<16x128xf32, #tpu.memory_space<vmem>>, %arg3: memref<16x128xf32, #tpu.memory_space<vmem>>, %arg4: memref<8x128xf32, #tpu.memory_space<vmem>>) attributes {dimension_semantics = [#tpu.dimension_semantics<parallel>], iteration_bounds = array<i64: 1>, scalar_prefetch = 0 : i64, scratch_operands = 0 : i64, tpu.core_type = #tpu.core_type<tc>, window_params = [{transform_indices = @transform_0, window_bounds = array<i64: 16, 128>}, {transform_indices = @transform_1, window_bounds = array<i64: 16, 128>}, {transform_indices = @transform_2, window_bounds = array<i64: 16, 128>}, {transform_indices = @transform_3, window_bounds = array<i64: 8, 128>}]} {
    %c0 = arith.constant 0 : index
    %c0_0 = arith.constant 0 : index
    %0 = vector.load %arg1[%c0, %c0_0] : memref<16x128xf32, #tpu.memory_space<vmem>>, vector<16x128xf32>
    %c0_1 = arith.constant 0 : index
    %c0_2 = arith.constant 0 : index
    %1 = vector.load %arg2[%c0_1, %c0_2] : memref<16x128xf32, #tpu.memory_space<vmem>>, vector<16x128xf32>
    %cst = arith.constant 1.000000e+00 : f32
    %2 = vector.broadcast %cst : f32 to vector<16x128xf32>
    %3 = arith.addf %2, %0 : vector<16x128xf32>
    %4 = arith.subf %3, %1 : vector<16x128xf32>
    %cst_3 = arith.constant 0.000000e+00 : f32
    %5 = vector.broadcast %cst_3 : f32 to vector<16x128xf32>
    %6 = arith.maximumf %4, %5 : vector<16x128xf32>
    %7 = tpu.iota {dimensions = array<i32: 0>} : vector<16x128xi32>
    %8 = tpu.iota {dimensions = array<i32: 1>} : vector<16x128xi32>
    %c16_i32 = arith.constant 16 : i32
    %9 = arith.muli %arg0, %c16_i32 : i32
    %10 = vector.broadcast %9 : i32 to vector<16x128xi32>
    %11 = arith.addi %10, %7 : vector<16x128xi32>
    %c128_i32 = arith.constant 128 : i32
    %12 = vector.broadcast %c128_i32 : i32 to vector<16x128xi32>
    %13 = arith.muli %11, %12 : vector<16x128xi32>
    %14 = arith.addi %13, %8 : vector<16x128xi32>
    %c300_i32 = arith.constant 300 : i32
    %15 = vector.broadcast %c300_i32 : i32 to vector<16x128xi32>
    %16 = arith.cmpi slt, %14, %15 : vector<16x128xi32>
    %cst_4 = arith.constant 0.000000e+00 : f32
    %17 = vector.broadcast %cst_4 : f32 to vector<16x128xf32>
    %18 = arith.select %16, %6, %17 : vector<16x128xi1>, vector<16x128xf32>
    %c0_5 = arith.constant 0 : index
    %c0_6 = arith.constant 0 : index
    %19 = vector.load %arg3[%c0_5, %c0_6] : memref<16x128xf32, #tpu.memory_space<vmem>>, vector<16x128xf32>
    tpu.vector_store %arg3[%c0_5, %c0_6], %18 {strides = array<i32>} : memref<16x128xf32, #tpu.memory_space<vmem>>, vector<16x128xf32>,
    %20 = vector.shape_cast %18 : vector<16x128xf32> to vector<2x8x128xf32>
    %cst_7 = arith.constant dense<0.000000e+00> : vector<8x128xf32>
    %21 = vector.multi_reduction <add>, %20, %cst_7 [0] : vector<2x8x128xf32> to vector<8x128xf32>
    %c0_8 = arith.constant 0 : index
    %c0_9 = arith.constant 0 : index
    %22 = vector.load %arg4[%c0_8, %c0_9] : memref<8x128xf32, #tpu.memory_space<vmem>>, vector<8x128xf32>
    tpu.vector_store %arg4[%c0_8, %c0_9], %21 {strides = array<i32>} : memref<8x128xf32, #tpu.memory_space<vmem>>, vector<8x128xf32>,
    return
  }
  func.func @transform_0(%arg0: i32) -> (i32, i32) {
    %c0_i32 = arith.constant 0 : i32
    %c0_i32_0 = arith.constant 0 : i32
    return %arg0, %c0_i32 : i32, i32
  }
  func.func @transform_1(%arg0: i32) -> (i32, i32) {
    %c0_i32 = arith.constant 0 : i32
    %c0_i32_0 = arith.constant 0 : i32
    return %arg0, %c0_i32 : i32, i32
  }
  func.func @transform_2(%arg0: i32) -> (i32, i32) {
    %c0_i32 = arith.constant 0 : i32
    %c0_i32_0 = arith.constant 0 : i32
    return %arg0, %c0_i32 : i32, i32
  }
  func.func @transform_3(%arg0: i32) -> (i32, i32) {
    %c0_i32 = arith.constant 0 : i32
    %c0_i32_0 = arith.constant 0 : i32
    return %arg0, %c0_i32 : i32, i32
  }
}

</mosaic_0001>

<llo_original>
// kernel: tpu_custom_call.1
$region0: #{tpu_custom_call.1}
  #allocation0 [shape = 'u32[]', space=smem, size = 0x4, offset = 0x4, fixed_abs, tag = 'smem constant byte address 0x4 - core index']
  #allocation1 [shape = 'u32[72,128]{1,0:T(1,128)}', space=vmem, size = 0x9000, scoped, tag = 'internal scratch']
  %s0 = inlined_call_operand.hbm [shape: f32[3,128], index: 0, kind: input, shape index: {}]
  %s1 = inlined_call_operand.hbm [shape: f32[3,128], index: 1, kind: input, shape index: {}]
  %s2 = inlined_call_operand.hbm [shape: f32[3,128], index: 2, kind: output, shape index: {0}]
  %s3 = inlined_call_operand.hbm [shape: f32[8,128], index: 3, kind: output, shape index: {1}]
  %4 = xla_tuple %s2, %s3
  %s5 = sld [smem:[#allocation0]]
  $region34: #{tpu_custom_call.1} parent=0
    _
  %s7 = ssub.s32 1, %s5
  %s8 = scalar_select 0, %s7, %s5
  $region1: #{tpu_custom_call.1} parent=0
    #allocation2 [shape = 'u8[8192]{0}', space=vmem, size = 0x2000, scoped, tag = 'input window, operand 0, single buffered']
    #allocation3 [shape = 's32[1]{0}', space=sflag, size = 0x4, scoped, tag = 'scoped memory for tpu_custom_call.1']
    #allocation4 [shape = 's32[1]{0}', space=sflag, size = 0x4, scoped, tag = 'scoped memory for tpu_custom_call.1']
    #allocation5 [shape = 'u8[8192]{0}', space=vmem, size = 0x2000, scoped, tag = 'input window, operand 1, single buffered']
    #allocation6 [shape = 's32[1]{0}', space=sflag, size = 0x4, scoped, tag = 'scoped memory for tpu_custom_call.1']
    #allocation7 [shape = 'u8[8192]{0}', space=vmem, size = 0x2000, scoped, tag = 'output window, operand 0, single buffered']
    #allocation8 [shape = 'u8[4096]{0}', space=vmem, size = 0x1000, scoped, tag = 'output window, operand 1, single buffered']
    #allocation9 [shape = 's32[1]{0}', space=sflag, size = 0x4, scoped, tag = 'scoped memory for tpu_custom_call.1']
    %9 = vsyncpa [#allocation3], 0
    %10 = vsyncpa [#allocation6], 0
    %11 = vsyncpa [#allocation4], 0
    %12 = vsyncpa [#allocation9], 0
    // Predicated region
    $region2: #{tpu_custom_call.1} parent=1 // pred_check
      _
    $region3: #{tpu_custom_call.1} parent=1 // pred_check_branch
      %14 = sbr.rel (0) target = $region5
    $region4: #{tpu_custom_call.1} parent=1 // pred_region
      %16 = vsyncadd [#allocation3], 192
      %s17 = sshll.u32 %s0, 4
      %s18 = int_to_ptr.hbm [resolvable:$true] %s17
      %s19 = sshll.u32 [#allocation2], 4
      %s20 = int_to_ptr.vmem [resolvable:$true] %s19
      %25 = dma.hbm_to_vmem [thread:$0]  %s18, 64, %s20, [#allocation3], 64, 64, 4
    $region5: #{tpu_custom_call.1} parent=1 // pred_fallthru
      _
    // Predicated region
    $region6: #{tpu_custom_call.1} parent=1 // pred_check
      _
    $region7: #{tpu_custom_call.1} parent=1 // pred_check_branch
      %27 = sbr.rel (0) target = $region9
    $region8: #{tpu_custom_call.1} parent=1 // pred_region
      %29 = vsyncadd [#allocation6], 192
      %s30 = sshll.u32 %s1, 4
      %s31 = int_to_ptr.hbm [resolvable:$true] %s30
      %s32 = sshll.u32 [#allocation5], 4
      %s33 = int_to_ptr.vmem [resolvable:$true] %s32
      %38 = dma.hbm_to_vmem [thread:$0]  %s31, 64, %s33, [#allocation6], 64, 64, 4
    $region9: #{tpu_custom_call.1} parent=1 // pred_fallthru
      _
    // Predicated region
    $region10: #{tpu_custom_call.1} parent=1 // pred_check
      _
    $region11: #{tpu_custom_call.1} parent=1 // pred_check_branch
      %40 = sbr.rel (0) target = $region13
    $region12: #{tpu_custom_call.1} parent=1 // pred_region
      %42 = dma.done [#allocation3], 256
    $region13: #{tpu_custom_call.1} parent=1 // pred_fallthru
      _
    // Predicated region
    $region14: #{tpu_custom_call.1} parent=1 // pred_check
      _
    $region15: #{tpu_custom_call.1} parent=1 // pred_check_branch
      %44 = sbr.rel (0) target = $region17
    $region16: #{tpu_custom_call.1} parent=1 // pred_region
      %46 = dma.done [#allocation6], 256
    $region17: #{tpu_custom_call.1} parent=1 // pred_fallthru
      _
    %v47 = vld [vmem:[#allocation2] sm:$0xff]
    %v48 = vld [vmem:[#allocation2 + $0x8] sm:$0xff]
    %v49 = vld [vmem:[#allocation5] sm:$0xff]
    %v50 = vld [vmem:[#allocation5 + $0x8] sm:$0xff]
    %v51 = vadd.f32 %v47, 1.0
    %v52 = vadd.f32 %v48, 1.0
    %v53 = vsub.f32 %v51, %v49
    %v54 = vsub.f32 %v52, %v50
    %v55 = vmax.f32 %v53, 0.0
    %v56 = vmax.f32 %v54, 0.0
    %v57 = vlaneseq
    %v58 = vshrl.u32 %v57, 7
    %v59 = vadd.s32 %v58, 8
    %v60 = vlaneseq
    %v61 = vand.u32 %v60, 127
    %s62 = smul.u32 0, 16
    %v63 = vstv %s62
    %v64 = vadd.s32 %v63, %v58
    %v65 = vadd.s32 %v63, %v59
    %v66 = vmul.u32 %v64, 128
    %v67 = vmul.u32 %v65, 128
    %v68 = vadd.s32 %v66, %v61
    %v69 = vadd.s32 %v67, %v61
    %vm70 = vcmp.lt.s32.totalorder %v68, 300
    %vm71 = vcmp.lt.s32.totalorder %v69, 300
    %v72 = vsel %vm70, %v55, 0.0
    %v73 = vsel %vm71, %v56, 0.0
    %74 = vst [vmem:[#allocation7] sm:$0xff] %v72
    %75 = vst [vmem:[#allocation7 + $0x8] sm:$0xff] %v73
    %v76 = vadd.f32 %v72, %v73
    %77 = vst [vmem:[#allocation8] sm:$0xff] %v76
    // Predicated region
    $region18: #{tpu_custom_call.1} parent=1 // pred_check
      _
    $region19: #{tpu_custom_call.1} parent=1 // pred_check_branch
      %79 = sbr.rel (0) target = $region21
    $region20: #{tpu_custom_call.1} parent=1 // pred_region
      %81 = vsyncadd [#allocation4], 192
      %s82 = sshll.u32 [#allocation7], 4
      %s83 = int_to_ptr.vmem [resolvable:$true] %s82
      %s84 = sshll.u32 %s2, 4
      %s85 = int_to_ptr.hbm [resolvable:$true] %s84
      %90 = dma.vmem_to_hbm [thread:$0]  %s83, 64, %s85, [#allocation4], 64, 64, 4
    $region21: #{tpu_custom_call.1} parent=1 // pred_fallthru
      _
    // Predicated region
    $region22: #{tpu_custom_call.1} parent=1 // pred_check
      _
    $region23: #{tpu_custom_call.1} parent=1 // pred_check_branch
      %92 = sbr.rel (0) target = $region25
    $region24: #{tpu_custom_call.1} parent=1 // pred_region
      %94 = vsyncadd [#allocation9], 0
      %s96 = sshll.u32 [#allocation8], 4
      %s97 = int_to_ptr.vmem [resolvable:$true] %s96
      %s98 = sshll.u32 %s3, 4
      %s99 = int_to_ptr.hbm [resolvable:$true] %s98
      %101 = dma.vmem_to_hbm [thread:$0]  %s97, 128, %s99, [#allocation9]
    $region25: #{tpu_custom_call.1} parent=1 // pred_fallthru
      _
    // Predicated region
    $region26: #{tpu_custom_call.1} parent=1 // pred_check
      _
    $region27: #{tpu_custom_call.1} parent=1 // pred_check_branch
      %103 = sbr.rel (0) target = $region29
    $region28: #{tpu_custom_call.1} parent=1 // pred_region
      %105 = dma.done [#allocation4], 256
    $region29: #{tpu_custom_call.1} parent=1 // pred_fallthru
      _
    // Predicated region
    $region30: #{tpu_custom_call.1} parent=1 // pred_check
      _
    $region31: #{tpu_custom_call.1} parent=1 // pred_check_branch
      %107 = sbr.rel (0) target = $region33
    $region32: #{tpu_custom_call.1} parent=1 // pred_region
      %109 = dma.done [#allocation9], 128
    $region33: #{tpu_custom_call.1} parent=1 // pred_fallthru
      _
    %110 = vsyncpa [#allocation3], 1
    %111 = vsyncpa [#allocation6], 1
    %112 = vsyncpa [#allocation4], 1
    %113 = vsyncpa [#allocation9], 1

</llo_original>
